<compile_context>
chip_gen: v7x
topology: tpu7x:2x2x1
jax: 0.10.0
libtpu: 0.0.40
codegen_flags: <defaults>
</compile_context>

<pallas_src>
import functools

import jax
import jax.numpy as jnp
from jax.experimental import pallas as pl
from jax.experimental.pallas import tpu as pltpu


def _miss_classification_kernel(preds_ref, labels_ref, out_ref,
                                *, total_n, tile_n, need_mask):
    """Writes the miss count of this tile into out_ref[0, 0] (int32)."""
    i = pl.program_id(0)

    logits = preds_ref[...]                                  # (tile_n, C), native dtype
    labels = labels_ref[...]                                 # (tile_n, 1), int32
    tn, c = logits.shape

    # argmax over dim=1 on the raw logits (softmax is monotone); first
    # occurrence of the max, matching torch.max tie-breaking.
    m = jnp.max(logits, axis=1, keepdims=True)               # (tile_n, 1)
    col = jax.lax.broadcasted_iota(jnp.int32, logits.shape, 1)
    idx = jnp.min(jnp.where(logits == m, col, jnp.int32(c)),
                  axis=1, keepdims=True)                     # (tile_n, 1) int32

    miss_mask = idx != labels                                # (tile_n, 1) bool
    if need_mask:
        # Only the (possibly partial) last tile has padded rows.
        row = jax.lax.broadcasted_iota(jnp.int32, (tn, 1), 0)
        valid = (i * tile_n + row) < total_n
        miss_mask = miss_mask & valid

    out_ref[0, 0] = jnp.sum(miss_mask.astype(jnp.int32))     # exact int32 count


def _vmem_plan():
    """(total double-buffer byte budget, scoped-VMEM limit) for this chip."""
    try:
        cap = int(getattr(pltpu.get_tpu_info(), "vmem_capacity_bytes", 128 << 20))
    except Exception:  # e.g. interpret mode / no TPU info available
        cap = 128 << 20
    # Total budget across all double-buffered input streams; leave plenty of
    # headroom under physical VMEM (64 MiB on v7x, 128 MiB on v5e/v6e).
    budget = min(cap // 3, 24 << 20)
    # Raise the scoped-VMEM limit (v5e default is only 16 MiB); never exceed
    # physical capacity minus headroom.
    limit = min(max(budget + (8 << 20), 32 << 20), cap - (8 << 20))
    return budget, limit


def _choose_tile_n(n, c, itemsize, budget_bytes):
    """Rows per block given a total byte budget for the double-buffered streams.

    Per-row VMEM cost:
      logits: c * itemsize bytes          (x2 buffers)
      labels: (tile_n, 1) int32 block is lane-padded to 128 lanes -> 512 B/row
              (x2 buffers)  -- counted so large tiles never blow VMEM.
    """
    per_row = 2 * (c * itemsize + 512)
    tile = max(1, budget_bytes // per_row)
    if tile >= n:
        return n                              # whole array as one block (always legal)
    # Round to the dtype's sublane-packing multiple.
    if itemsize >= 4:
        mult = 8
    elif itemsize == 2:
        mult = 16
    else:
        mult = 32
    return max(mult, (tile // mult) * mult)


def miss_classification(preds: jax.Array, labels: jax.Array,
                        tile_n: int | None = None) -> jax.Array:
    """preds: (N, C) logits (any float dtype); labels: (N,) int ids. Returns scalar f32."""
    n, c = preds.shape
    labels2d = labels.reshape(n, 1).astype(jnp.int32)

    budget, vmem_limit = _vmem_plan()
    if tile_n is None:
        tile_n = _choose_tile_n(n, c, preds.dtype.itemsize, budget)
    num_tiles = pl.cdiv(n, tile_n)
    need_mask = (n % tile_n) != 0

    kernel = functools.partial(_miss_classification_kernel,
                               total_n=n, tile_n=tile_n, need_mask=need_mask)

    partial = pl.pallas_call(
        kernel,
        out_shape=jax.ShapeDtypeStruct((num_tiles, 1), jnp.int32),
        grid=(num_tiles,),
        in_specs=[
            pl.BlockSpec((tile_n, c), lambda i: (i, 0)),     # logits tile (VMEM)
            pl.BlockSpec((tile_n, 1), lambda i: (i, 0)),     # labels tile (VMEM)
        ],
        out_specs=pl.BlockSpec((1, 1), lambda i: (i, 0),     # per-tile miss count
                               memory_space=pltpu.MemorySpace.SMEM),
        compiler_params=pltpu.CompilerParams(
            dimension_semantics=("parallel",),               # independent tiles
            vmem_limit_bytes=vmem_limit),
    )(preds, labels2d)

    # Final reduction of a few int32s + the `1 - miss/N` epilogue in XLA (free).
    miss_total = jnp.sum(partial).astype(jnp.float32)
    return jnp.float32(1.0) - miss_total / jnp.float32(n)


if __name__ == "__main__":
    key = jax.random.PRNGKey(0)
    k_preds, k_labels, k_preds2, k_labels2 = jax.random.split(key, 4)

    # Small case: single block.
    N, C = 8, 16
    preds = jax.random.normal(k_preds, (N, C), dtype=jnp.float32)
    labels = jax.random.randint(k_labels, (N,), 0, C, dtype=jnp.int32)

    result = miss_classification(preds, labels)
    jax.block_until_ready(result)

    ref_pred = jnp.argmax(jax.nn.softmax(preds, axis=1), axis=1)
    ref = 1.0 - jnp.sum(ref_pred != labels).astype(jnp.float32) / N
    assert jnp.allclose(result, ref, atol=1e-6), (result, ref)

    # Tiled case: multiple grid steps with a partial (masked) last tile and a
    # multi-element per-tile partial output reduced in the wrapper.
    N2, C2 = 20, 16
    preds2 = jax.random.normal(k_preds2, (N2, C2), dtype=jnp.float32)
    labels2 = jax.random.randint(k_labels2, (N2,), 0, C2, dtype=jnp.int32)

    result2 = miss_classification(preds2, labels2, tile_n=8)   # grid = 3, last tile = 4 rows
    jax.block_until_ready(result2)

    ref_pred2 = jnp.argmax(jax.nn.softmax(preds2, axis=1), axis=1)
    ref2 = 1.0 - jnp.sum(ref_pred2 != labels2).astype(jnp.float32) / N2
    assert jnp.allclose(result2, ref2, atol=1e-6), (result2, ref2)

    print("KERNEL_OK")
</pallas_src>

<mosaic_0001>
module attributes {stable_mosaic.version = 11 : i64} {
  func.func @_miss_classification_kernel(%arg0: i32, %arg1: memref<8x16xf32, #tpu.memory_space<vmem>>, %arg2: memref<8x1xi32, #tpu.memory_space<vmem>>, %arg3: memref<1x1xi32, #tpu.memory_space<smem>>) attributes {dimension_semantics = [#tpu.dimension_semantics<parallel>], iteration_bounds = array<i64: 1>, scalar_prefetch = 0 : i64, scratch_operands = 0 : i64, tpu.core_type = #tpu.core_type<tc>, window_params = [{transform_indices = @transform_0, window_bounds = array<i64: 8, 16>}, {transform_indices = @transform_1, window_bounds = array<i64: 8, 1>}, {transform_indices = @transform_2, window_bounds = array<i64: 1, 1>}]} {
    %c0 = arith.constant 0 : index
    %c0_0 = arith.constant 0 : index
    %0 = vector.load %arg1[%c0, %c0_0] : memref<8x16xf32, #tpu.memory_space<vmem>>, vector<8x16xf32>
    %c0_1 = arith.constant 0 : index
    %c0_2 = arith.constant 0 : index
    %1 = vector.load %arg2[%c0_1, %c0_2] : memref<8x1xi32, #tpu.memory_space<vmem>>, vector<8x1xi32>
    %cst = arith.constant dense<0xFF800000> : vector<8xf32>
    %2 = vector.multi_reduction <maximumf>, %0, %cst [1] : vector<8x16xf32> to vector<8xf32>
    %3 = vector.shape_cast %2 : vector<8xf32> to vector<8x1xf32>
    %4 = tpu.iota {dimensions = array<i32: 1>} : vector<8x16xi32>
    %5 = vector.broadcast %3 : vector<8x1xf32> to vector<8x16xf32>
    %6 = arith.cmpf oeq, %0, %5 : vector<8x16xf32>
    %c16_i32 = arith.constant 16 : i32
    %7 = vector.broadcast %c16_i32 : i32 to vector<8x16xi32>
    %8 = arith.select %6, %4, %7 : vector<8x16xi1>, vector<8x16xi32>
    %cst_3 = arith.constant dense<2147483647> : vector<8xi32>
    %9 = vector.multi_reduction <minsi>, %8, %cst_3 [1] : vector<8x16xi32> to vector<8xi32>
    %10 = vector.shape_cast %9 : vector<8xi32> to vector<8x1xi32>
    %11 = arith.cmpi ne, %10, %1 : vector<8x1xi32>
    %12 = arith.extui %11 : vector<8x1xi1> to vector<8x1xi32>
    %13 = vector.shape_cast %12 : vector<8x1xi32> to vector<1x8x1xi32>
    %cst_4 = arith.constant dense<0> : vector<1xi32>
    %14 = vector.multi_reduction <add>, %13, %cst_4 [1, 2] : vector<1x8x1xi32> to vector<1xi32>
    %15 = vector.shape_cast %14 : vector<1xi32> to vector<1x1x1xi32>
    %16 = vector.extract %15[0, 0, 0] : i32 from vector<1x1x1xi32>
    %c0_5 = arith.constant 0 : index
    %c0_6 = arith.constant 0 : index
    %17 = memref.load %arg3[%c0_5, %c0_6] : memref<1x1xi32, #tpu.memory_space<smem>>
    memref.store %16, %arg3[%c0_5, %c0_6] : memref<1x1xi32, #tpu.memory_space<smem>>
    return
  }
  func.func @transform_0(%arg0: i32) -> (i32, i32) {
    %c0_i32 = arith.constant 0 : i32
    %c0_i32_0 = arith.constant 0 : i32
    return %arg0, %c0_i32 : i32, i32
  }
  func.func @transform_1(%arg0: i32) -> (i32, i32) {
    %c0_i32 = arith.constant 0 : i32
    %c0_i32_0 = arith.constant 0 : i32
    return %arg0, %c0_i32 : i32, i32
  }
  func.func @transform_2(%arg0: i32) -> (i32, i32) {
    %c0_i32 = arith.constant 0 : i32
    %c0_i32_0 = arith.constant 0 : i32
    return %arg0, %c0_i32 : i32, i32
  }
}

</mosaic_0001>

<llo_original>
// kernel: tpu_custom_call.1
$region0: #{tpu_custom_call.1}
  #allocation0 [shape = 'u32[]', space=smem, size = 0x4, offset = 0x4, fixed_abs, tag = 'smem constant byte address 0x4 - core index']
  #allocation1 [shape = 'u32[144,128]{1,0:T(1,128)}', space=vmem, size = 0x12000, scoped, tag = 'internal scratch']
  %s0 = inlined_call_operand.vmem [shape: f32[8,16], index: 0, kind: input, shape index: {}]
  %s1 = inlined_call_operand.vmem [shape: s32[8,1], index: 1, kind: input, shape index: {}]
  %s2 = inlined_call_operand.hbm [shape: s32[1,1], index: 2, kind: output, shape index: {}]
  %s3 = sld [smem:[#allocation0]]
  $region18: #{tpu_custom_call.1} parent=0
    _
  %s5 = ssub.s32 1, %s3
  %s6 = scalar_select 0, %s5, %s3
  $region1: #{tpu_custom_call.1} parent=0
    #allocation2 [shape = 'u8[512]{0}', space=smem, size = 0x200, scoped, tag = 'output window, operand 0, single buffered']
    #allocation3 [shape = 's32[1]{0}', space=sflag, size = 0x4, scoped, tag = 'scoped memory for tpu_custom_call.1']
    %7 = vsyncpa [#allocation3], 0
    // Predicated region
    $region2: #{tpu_custom_call.1} parent=1 // pred_check
      _
    $region3: #{tpu_custom_call.1} parent=1 // pred_check_branch
      %9 = sbr.rel (0) target = $region5
    $region4: #{tpu_custom_call.1} parent=1 // pred_region
      _
    $region5: #{tpu_custom_call.1} parent=1 // pred_fallthru
      _
    // Predicated region
    $region6: #{tpu_custom_call.1} parent=1 // pred_check
      _
    $region7: #{tpu_custom_call.1} parent=1 // pred_check_branch
      %11 = sbr.rel (0) target = $region9
    $region8: #{tpu_custom_call.1} parent=1 // pred_region
      _
    $region9: #{tpu_custom_call.1} parent=1 // pred_fallthru
      _
    %v12 = vld [vmem:[%s0] sm:$0xff]
    %v13 = vld [vmem:[%s1] sm:$0xff]
    %vm14 = vcmask 130048
    %v15 = vsel %vm14, %v12, -inf
    %16 = vmax.xlane.f32.xlu0 %v15
    %v17 = vpop.xlane.xlu0 %16
    %v18 = vlaneseq
    %v19 = vand.u32 %v18, 127
    %vm20 = vcmp.eq.f32.partialorder %v12, %v17
    %v21 = vsel %vm20, %v19, 16
    %v22 = vsel %vm14, %v21, 2147483647
    %v23 = vand.u32 %v22, 65535
    %v24 = vshra.s32 %v22, 16
    %v25 = vcvt.s32.f32 %v23
    %v26 = vcvt.s32.f32 %v24
    %27 = vmin.xlane.f32.xlu0 %v26
    %v28 = vpop.xlane.xlu0 %27
    %vm29 = vcmp.eq.f32.partialorder %v26, %v28
    %v30 = vsel %vm29, %v25, inf
    %31 = vmin.xlane.f32.xlu0 %v30
    %v32 = vpop.xlane.xlu0 %31
    %v33 = vcvt.f32.s32 %v32
    %v34 = vcvt.f32.s32 %v28
    %v35 = vshll.u32 %v34, 16
    %v36 = vadd.s32 %v35, %v33
    %vm37 = vcmp.ne.s32.totalorder %v36, %v13
    %v38 = vsel %vm37, 1, 0
    %vm39 = vcmask 7168
    %v40 = vsel %vm39, %v38, 0
    %v41 = vand.u32 %v40, 65535
    %v42 = vshrl.u32 %v40, 16
    %v43 = vcvt.s32.f32 %v41
    %v44 = vcvt.s32.f32 %v42
    %45 = vadd.xlane.f32.xlu0 %v43
    %v46 = vpop.xlane.xlu0 %45
    %47 = vadd.xlane.f32.xlu0 %v44
    %v48 = vpop.xlane.xlu0 %47
    %v49 = vcvt.f32.s32 %v46
    %v50 = vcvt.f32.s32 %v48
    %v51 = vshll.u32 %v50, 16
    %v52 = vadd.s32 %v51, %v49
    %v53 = vrot.slane %v52, 4
    %v54 = vadd.s32 %v52, %v53
    %v55 = vrot.slane %v54, 2
    %v56 = vadd.s32 %v54, %v55
    %v57 = vrot.slane %v56, 1
    %v58 = vadd.s32 %v56, %v57
    %s59 = vtos %v58
    %s60 = scalar_lea.smem [#allocation2], 0
    %61 = sst [smem:[%s60]] %s59
    // Predicated region
    $region10: #{tpu_custom_call.1} parent=1 // pred_check
      _
    $region11: #{tpu_custom_call.1} parent=1 // pred_check_branch
      %63 = sbr.rel (0) target = $region13
    $region12: #{tpu_custom_call.1} parent=1 // pred_region
      %s65 = ssub.s32 16, 16
      %66 = vsyncadd [#allocation3], %s65
      %69 = dma.smem_to_hbm [#allocation2], 16, %s2, [#allocation3]
    $region13: #{tpu_custom_call.1} parent=1 // pred_fallthru
      _
    // Predicated region
    $region14: #{tpu_custom_call.1} parent=1 // pred_check
      _
    $region15: #{tpu_custom_call.1} parent=1 // pred_check_branch
      %71 = sbr.rel (0) target = $region17
    $region16: #{tpu_custom_call.1} parent=1 // pred_region
      %72 = dma.done [#allocation3], 16
    $region17: #{tpu_custom_call.1} parent=1 // pred_fallthru
      _
    %73 = sfence
    %74 = vsyncpa [#allocation3], 1

</llo_original>
